<compile_context>
chip_gen: v7x
topology: tpu7x:2x2x1
jax: 0.10.0
libtpu: 0.0.40
codegen_flags: <defaults>
</compile_context>

<pallas_src>
import jax
import jax.numpy as jnp
from jax.experimental import pallas as pl
from jax.experimental.pallas import tpu as pltpu


def _round_up(x, m):
    return ((x + m - 1) // m) * m


def _nts_notears_kernel(x_ref, halo_ref, w_ref, b1_ref, fcw_ref, b2_ref, out_ref):
    d, tl = x_ref.shape          # [d, TL]  lane dim = time
    k = w_ref.shape[0]           # taps (lags + 1)
    m1 = fcw_ref.shape[1]

    # Time slab for this tile with right halo: [d, TL + HALO].
    slab = jnp.concatenate([x_ref[...], halo_ref[0]], axis=1)

    # Stage 1: conv1d_pos - conv1d_neg as k shifted-window MXU matmuls,
    # f32 accumulation:  h[c, t] = sum_{i,tau} w_eff[c, i, tau] * x[i, t + tau].
    acc = jnp.dot(w_ref[0], slab[:, :tl], preferred_element_type=jnp.float32)
    for tau in range(1, k):
        acc = acc + jnp.dot(w_ref[tau], slab[:, tau:tau + tl],
                            preferred_element_type=jnp.float32)

    # Stage 2: sigmoid (EUP, f32) then LocallyConnected(d, m1, 1) as a VPU
    # multiply + sublane reduction over m1 (lane dim = time stays dense).
    s = jax.nn.sigmoid(acc + b1_ref[...])               # [d*m1, TL]
    s = s.reshape(d, m1, tl)                            # [d, m1, TL]
    o = jnp.sum(s * fcw_ref[...], axis=1)               # [d, TL]
    out_ref[...] = (o + b2_ref[...]).astype(out_ref.dtype)


def nts_notears_forward(x_series, w_pos, b_pos, w_neg, b_neg, fc_w, fc_b,
                        number_of_lags, *, tile_l=512, use_bf16=False):
    """x_series: [1, d, n]; conv weights [d*m1, d, k]; fc_w [d, m1, 1]; fc_b [d, 1].

    Returns [L, d] with L = n - (number_of_lags + 1) + 1, matching the module.
    """
    d = x_series.shape[1]
    n = x_series.shape[2]
    k = number_of_lags + 1
    L = n - k + 1
    m1 = fc_w.shape[1]
    assert L >= 1 and fc_w.shape == (d, m1, 1)
    assert tile_l % 128 == 0

    halo = max(128, _round_up(k - 1, 128))      # covers the k-1 extra taps, lane-aligned
    tl = max(128, min(tile_l, _round_up(L, 128)))
    nt = -(-L // tl)                            # number of L tiles
    l_pad = nt * tl
    n_pad = l_pad + halo

    in_dtype = jnp.bfloat16 if use_bf16 else jnp.float32

    # Effective conv weights (pos - neg), per-tap layout [k, d*m1, d]; f32 biases.
    w_eff = (w_pos - w_neg).astype(jnp.float32)
    w_taps = jnp.transpose(w_eff, (2, 0, 1)).astype(in_dtype)        # [k, d*m1, d]
    b1 = (b_pos - b_neg).astype(jnp.float32).reshape(d * m1, 1)      # [d*m1, 1]
    fcw = fc_w.astype(jnp.float32)                                   # [d, m1, 1]
    b2 = fc_b.astype(jnp.float32).reshape(d, 1)                      # [d, 1]

    # Channel-major, time-on-lanes input, zero-padded so every tile + halo is in range.
    x2d = jnp.pad(x_series[0].astype(in_dtype), ((0, 0), (0, n_pad - n)))   # [d, n_pad]
    # Tiny per-tile right-halo slab [nt, d, HALO] (only ~HALO/TL extra traffic).
    cols = (jnp.arange(nt)[:, None] + 1) * tl + jnp.arange(halo)[None, :]
    x_halo = jnp.transpose(x2d[:, cols], (1, 0, 2))                   # [nt, d, HALO]

    out_t = pl.pallas_call(
        _nts_notears_kernel,
        out_shape=jax.ShapeDtypeStruct((d, l_pad), jnp.float32),
        grid=(nt,),
        in_specs=[
            pl.BlockSpec((d, tl), lambda i: (0, i)),            # x tile, pipelined
            pl.BlockSpec((1, d, halo), lambda i: (i, 0, 0)),    # right halo
            pl.BlockSpec((k, d * m1, d), lambda i: (0, 0, 0)),  # resident weights
            pl.BlockSpec((d * m1, 1), lambda i: (0, 0)),
            pl.BlockSpec((d, m1, 1), lambda i: (0, 0, 0)),
            pl.BlockSpec((d, 1), lambda i: (0, 0)),
        ],
        out_specs=pl.BlockSpec((d, tl), lambda i: (0, i)),      # lane-dense output
        compiler_params=pltpu.CompilerParams(
            dimension_semantics=("parallel",),                  # v7x: 2 TCs
            vmem_limit_bytes=32 * 1024 * 1024),
    )(x2d, x_halo, w_taps, b1, fcw, b2)

    return out_t[:, :L].T                                       # [L, d]


def _reference_forward(x_series, w_pos, b_pos, w_neg, b_neg, fc_w, fc_b,
                       number_of_lags):
    """Pure-JAX reference mirroring the PyTorch forward exactly (f32)."""
    d = x_series.shape[1]
    m1 = fc_w.shape[1]
    conv = jax.lax.conv_general_dilated(
        x_series, (w_pos - w_neg), window_strides=(1,), padding="VALID",
        dimension_numbers=("NCH", "OIH", "NCH"))
    conv = conv + (b_pos - b_neg)[None, :, None]            # [1, d*m1, L]
    x = conv[0].T.reshape(-1, d, m1)                        # [L, d, m1]
    s = jax.nn.sigmoid(x)
    return jnp.einsum("ljm,jm->lj", s, fc_w[..., 0]) + fc_b[:, 0][None, :]


def _make_inputs(d, m1, k, n, key):
    keys = jax.random.split(key, 7)
    x_series = jax.random.normal(keys[0], (1, d, n), jnp.float32)
    w_pos = 0.1 * jax.random.normal(keys[1], (d * m1, d, k), jnp.float32)
    b_pos = 0.1 * jax.random.normal(keys[2], (d * m1,), jnp.float32)
    w_neg = 0.1 * jax.random.normal(keys[3], (d * m1, d, k), jnp.float32)
    b_neg = 0.1 * jax.random.normal(keys[4], (d * m1,), jnp.float32)
    fc_w = 0.1 * jax.random.normal(keys[5], (d, m1, 1), jnp.float32)
    fc_b = 0.1 * jax.random.normal(keys[6], (d, 1), jnp.float32)
    return x_series, w_pos, b_pos, w_neg, b_neg, fc_w, fc_b


if __name__ == "__main__":
    d, m1, number_of_lags = 4, 8, 2          # dims = [d, m1, 1]
    k = number_of_lags + 1
    key = jax.random.PRNGKey(0)

    # Case 1: small sequence, single tile, f32 (tight tolerance).
    args_small = _make_inputs(d, m1, k, 64, key)
    out = jax.block_until_ready(
        nts_notears_forward(*args_small, number_of_lags))
    ref = _reference_forward(*args_small, number_of_lags)
    assert out.shape == (64 - k + 1, d), out.shape
    assert jnp.allclose(out, ref, atol=1e-4, rtol=1e-4), float(
        jnp.max(jnp.abs(out - ref)))

    # Case 2: longer sequence => multi-tile grid (TL=512, 3 tiles), exercises
    # the halo handling across tile boundaries, f32.
    args_big = _make_inputs(d, m1, k, 1200, jax.random.PRNGKey(1))
    out_big = jax.block_until_ready(
        nts_notears_forward(*args_big, number_of_lags))
    ref_big = _reference_forward(*args_big, number_of_lags)
    assert out_big.shape == (1200 - k + 1, d), out_big.shape
    assert jnp.allclose(out_big, ref_big, atol=1e-4, rtol=1e-4), float(
        jnp.max(jnp.abs(out_big - ref_big)))

    # Case 3: same, with bf16 MXU inputs (v6e/v7x bandwidth optimization);
    # accumulation/sigmoid stay f32, so only a loose tolerance is needed.
    out_bf16 = jax.block_until_ready(
        nts_notears_forward(*args_big, number_of_lags, use_bf16=True))
    assert jnp.allclose(out_bf16, ref_big, atol=2e-2, rtol=2e-2), float(
        jnp.max(jnp.abs(out_bf16 - ref_big)))

    print("KERNEL_OK")
</pallas_src>

<mosaic_0001>
module attributes {stable_mosaic.version = 11 : i64} {
  func.func @_nts_notears_kernel(%arg0: i32, %arg1: memref<4x128xf32, #tpu.memory_space<vmem>>, %arg2: memref<1x4x128xf32, #tpu.memory_space<vmem>>, %arg3: memref<3x32x4xf32, #tpu.memory_space<vmem>>, %arg4: memref<32x1xf32, #tpu.memory_space<vmem>>, %arg5: memref<4x8x1xf32, #tpu.memory_space<vmem>>, %arg6: memref<4x1xf32, #tpu.memory_space<vmem>>, %arg7: memref<4x128xf32, #tpu.memory_space<vmem>>) attributes {dimension_semantics = [#tpu.dimension_semantics<parallel>], iteration_bounds = array<i64: 1>, scalar_prefetch = 0 : i64, scratch_operands = 0 : i64, tpu.core_type = #tpu.core_type<tc>, window_params = [{transform_indices = @transform_0, window_bounds = array<i64: 4, 128>}, {transform_indices = @transform_1, window_bounds = array<i64: 1, 4, 128>}, {pipeline_mode = #tpu.pipeline_mode<synchronous>, transform_indices = @transform_2, window_bounds = array<i64: 3, 32, 4>}, {pipeline_mode = #tpu.pipeline_mode<synchronous>, transform_indices = @transform_3, window_bounds = array<i64: 32, 1>}, {pipeline_mode = #tpu.pipeline_mode<synchronous>, transform_indices = @transform_4, window_bounds = array<i64: 4, 8, 1>}, {pipeline_mode = #tpu.pipeline_mode<synchronous>, transform_indices = @transform_5, window_bounds = array<i64: 4, 1>}, {transform_indices = @transform_6, window_bounds = array<i64: 4, 128>}]} {
    %c0 = arith.constant 0 : index
    %c0_0 = arith.constant 0 : index
    %0 = vector.load %arg1[%c0, %c0_0] : memref<4x128xf32, #tpu.memory_space<vmem>>, vector<4x128xf32>
    %c0_1 = arith.constant 0 : index
    %c0_2 = arith.constant 0 : index
    %c0_3 = arith.constant 0 : index
    %1 = vector.load %arg2[%c0_1, %c0_2, %c0_3] : memref<1x4x128xf32, #tpu.memory_space<vmem>>, vector<1x4x128xf32>
    %2 = vector.shape_cast %1 : vector<1x4x128xf32> to vector<4x128xf32>
    %3 = tpu.concatenate %0, %2 in 1 : vector<4x128xf32>, vector<4x128xf32> -> vector<4x256xf32>
    %c0_4 = arith.constant 0 : index
    %c0_5 = arith.constant 0 : index
    %c0_6 = arith.constant 0 : index
    %4 = vector.load %arg3[%c0_4, %c0_5, %c0_6] : memref<3x32x4xf32, #tpu.memory_space<vmem>>, vector<1x32x4xf32>
    %5 = vector.shape_cast %4 : vector<1x32x4xf32> to vector<32x4xf32>
    %6 = vector.extract_strided_slice %3 {offsets = [0, 0], sizes = [4, 128], strides = [1, 1]} : vector<4x256xf32> to vector<4x128xf32>
    %cst = arith.constant dense<0.000000e+00> : vector<32x128xf32>
    %7 = tpu.matmul %5, %6, %cst {dimension_numbers = #tpu.dot_dimension_numbers<[1], [0], [0], [1], [0, 0, 1, 1], [], []>} : vector<32x4xf32>, vector<4x128xf32>, vector<32x128xf32> -> vector<32x128xf32>
    %c1 = arith.constant 1 : index
    %c0_7 = arith.constant 0 : index
    %c0_8 = arith.constant 0 : index
    %8 = vector.load %arg3[%c1, %c0_7, %c0_8] : memref<3x32x4xf32, #tpu.memory_space<vmem>>, vector<1x32x4xf32>
    %9 = vector.shape_cast %8 : vector<1x32x4xf32> to vector<32x4xf32>
    %10 = vector.extract_strided_slice %3 {offsets = [0, 1], sizes = [4, 128], strides = [1, 1]} : vector<4x256xf32> to vector<4x128xf32>
    %cst_9 = arith.constant dense<0.000000e+00> : vector<32x128xf32>
    %11 = tpu.matmul %9, %10, %cst_9 {dimension_numbers = #tpu.dot_dimension_numbers<[1], [0], [0], [1], [0, 0, 1, 1], [], []>} : vector<32x4xf32>, vector<4x128xf32>, vector<32x128xf32> -> vector<32x128xf32>
    %12 = arith.addf %7, %11 : vector<32x128xf32>
    %c2 = arith.constant 2 : index
    %c0_10 = arith.constant 0 : index
    %c0_11 = arith.constant 0 : index
    %13 = vector.load %arg3[%c2, %c0_10, %c0_11] : memref<3x32x4xf32, #tpu.memory_space<vmem>>, vector<1x32x4xf32>
    %14 = vector.shape_cast %13 : vector<1x32x4xf32> to vector<32x4xf32>
    %15 = vector.extract_strided_slice %3 {offsets = [0, 2], sizes = [4, 128], strides = [1, 1]} : vector<4x256xf32> to vector<4x128xf32>
    %cst_12 = arith.constant dense<0.000000e+00> : vector<32x128xf32>
    %16 = tpu.matmul %14, %15, %cst_12 {dimension_numbers = #tpu.dot_dimension_numbers<[1], [0], [0], [1], [0, 0, 1, 1], [], []>} : vector<32x4xf32>, vector<4x128xf32>, vector<32x128xf32> -> vector<32x128xf32>
    %17 = arith.addf %12, %16 : vector<32x128xf32>
    %c0_13 = arith.constant 0 : index
    %c0_14 = arith.constant 0 : index
    %18 = vector.load %arg4[%c0_13, %c0_14] : memref<32x1xf32, #tpu.memory_space<vmem>>, vector<32x1xf32>
    %19 = vector.broadcast %18 : vector<32x1xf32> to vector<32x128xf32>
    %20 = arith.addf %17, %19 : vector<32x128xf32>
    %21 = arith.negf %20 : vector<32x128xf32>
    %22 = math.exp %21 : vector<32x128xf32>
    %cst_15 = arith.constant 1.000000e+00 : f32
    %23 = vector.broadcast %cst_15 : f32 to vector<32x128xf32>
    %24 = arith.addf %23, %22 : vector<32x128xf32>
    %25 = arith.divf %23, %24 : vector<32x128xf32>
    %26 = vector.shape_cast %25 : vector<32x128xf32> to vector<4x8x128xf32>
    %c0_16 = arith.constant 0 : index
    %c0_17 = arith.constant 0 : index
    %c0_18 = arith.constant 0 : index
    %27 = vector.load %arg5[%c0_16, %c0_17, %c0_18] : memref<4x8x1xf32, #tpu.memory_space<vmem>>, vector<4x8x1xf32>
    %28 = vector.broadcast %27 : vector<4x8x1xf32> to vector<4x8x128xf32>
    %29 = arith.mulf %26, %28 : vector<4x8x128xf32>
    %cst_19 = arith.constant dense<0.000000e+00> : vector<4x128xf32>
    %30 = vector.multi_reduction <add>, %29, %cst_19 [1] : vector<4x8x128xf32> to vector<4x128xf32>
    %c0_20 = arith.constant 0 : index
    %c0_21 = arith.constant 0 : index
    %31 = vector.load %arg6[%c0_20, %c0_21] : memref<4x1xf32, #tpu.memory_space<vmem>>, vector<4x1xf32>
    %32 = vector.broadcast %31 : vector<4x1xf32> to vector<4x128xf32>
    %33 = arith.addf %30, %32 : vector<4x128xf32>
    %c0_22 = arith.constant 0 : index
    %c0_23 = arith.constant 0 : index
    %34 = vector.load %arg7[%c0_22, %c0_23] : memref<4x128xf32, #tpu.memory_space<vmem>>, vector<4x128xf32>
    tpu.vector_store %arg7[%c0_22, %c0_23], %33 {strides = array<i32>} : memref<4x128xf32, #tpu.memory_space<vmem>>, vector<4x128xf32>,
    return
  }
  func.func @transform_0(%arg0: i32) -> (i32, i32) {
    %c0_i32 = arith.constant 0 : i32
    %c0_i32_0 = arith.constant 0 : i32
    return %c0_i32, %arg0 : i32, i32
  }
  func.func @transform_1(%arg0: i32) -> (i32, i32, i32) {
    %c0_i32 = arith.constant 0 : i32
    %c0_i32_0 = arith.constant 0 : i32
    %c0_i32_1 = arith.constant 0 : i32
    return %arg0, %c0_i32, %c0_i32_0 : i32, i32, i32
  }
  func.func @transform_2(%arg0: i32) -> (i32, i32, i32) {
    %c0_i32 = arith.constant 0 : i32
    %c0_i32_0 = arith.constant 0 : i32
    %c0_i32_1 = arith.constant 0 : i32
    %c0_i32_2 = arith.constant 0 : i32
    return %c0_i32, %c0_i32_0, %c0_i32_1 : i32, i32, i32
  }
  func.func @transform_3(%arg0: i32) -> (i32, i32) {
    %c0_i32 = arith.constant 0 : i32
    %c0_i32_0 = arith.constant 0 : i32
    %c0_i32_1 = arith.constant 0 : i32
    return %c0_i32, %c0_i32_0 : i32, i32
  }
  func.func @transform_4(%arg0: i32) -> (i32, i32, i32) {
    %c0_i32 = arith.constant 0 : i32
    %c0_i32_0 = arith.constant 0 : i32
    %c0_i32_1 = arith.constant 0 : i32
    %c0_i32_2 = arith.constant 0 : i32
    return %c0_i32, %c0_i32_0, %c0_i32_1 : i32, i32, i32
  }
  func.func @transform_5(%arg0: i32) -> (i32, i32) {
    %c0_i32 = arith.constant 0 : i32
    %c0_i32_0 = arith.constant 0 : i32
    %c0_i32_1 = arith.constant 0 : i32
    return %c0_i32, %c0_i32_0 : i32, i32
  }
  func.func @transform_6(%arg0: i32) -> (i32, i32) {
    %c0_i32 = arith.constant 0 : i32
    %c0_i32_0 = arith.constant 0 : i32
    return %c0_i32, %arg0 : i32, i32
  }
}

</mosaic_0001>

<llo_original>
// kernel: tpu_custom_call.1
$region0: #{tpu_custom_call.1}
  #allocation0 [shape = 'u32[]', space=smem, size = 0x4, offset = 0x4, fixed_abs, tag = 'smem constant byte address 0x4 - core index']
  #allocation1 [shape = 'u32[144,128]{1,0:T(1,128)}', space=vmem, size = 0x12000, scoped, tag = 'internal scratch']
  %s0 = inlined_call_operand.vmem [shape: f32[4,256], index: 0, kind: input, shape index: {}]
  %s1 = inlined_call_operand.vmem [shape: f32[1,4,128], index: 1, kind: input, shape index: {}]
  %s2 = inlined_call_operand.vmem [shape: f32[3,32,4], index: 2, kind: input, shape index: {}]
  %s3 = inlined_call_operand.vmem [shape: f32[32,1], index: 3, kind: input, shape index: {}]
  %s4 = inlined_call_operand.vmem [shape: f32[4,8,1], index: 4, kind: input, shape index: {}]
  %s5 = inlined_call_operand.vmem [shape: f32[4,1], index: 5, kind: input, shape index: {}]
  %s6 = inlined_call_operand.hbm [shape: f32[4,128], index: 6, kind: output, shape index: {}]
  %s7 = sld [smem:[#allocation0]]
  $region34: #{tpu_custom_call.1} parent=0
    _
  %s9 = ssub.s32 1, %s7
  %s10 = scalar_select 0, %s9, %s7
  $region1: #{tpu_custom_call.1} parent=0
    #allocation2 [shape = 'u8[2048]{0}', space=vmem, size = 0x800, scoped, tag = 'output window, operand 0, single buffered']
    #allocation3 [shape = 's32[1]{0}', space=sflag, size = 0x4, scoped, tag = 'scoped memory for tpu_custom_call.1']
    %11 = vsyncpa [#allocation3], 0
    // Predicated region
    $region2: #{tpu_custom_call.1} parent=1 // pred_check
      _
    $region3: #{tpu_custom_call.1} parent=1 // pred_check_branch
      %13 = sbr.rel (0) target = $region5
    $region4: #{tpu_custom_call.1} parent=1 // pred_region
      _
    $region5: #{tpu_custom_call.1} parent=1 // pred_fallthru
      _
    // Predicated region
    $region6: #{tpu_custom_call.1} parent=1 // pred_check
      _
    $region7: #{tpu_custom_call.1} parent=1 // pred_check_branch
      %15 = sbr.rel (0) target = $region9
    $region8: #{tpu_custom_call.1} parent=1 // pred_region
      _
    $region9: #{tpu_custom_call.1} parent=1 // pred_fallthru
      _
    // Predicated region
    $region10: #{tpu_custom_call.1} parent=1 // pred_check
      _
    $region11: #{tpu_custom_call.1} parent=1 // pred_check_branch
      %17 = sbr.rel (0) target = $region13
    $region12: #{tpu_custom_call.1} parent=1 // pred_region
      _
    $region13: #{tpu_custom_call.1} parent=1 // pred_fallthru
      _
    // Predicated region
    $region14: #{tpu_custom_call.1} parent=1 // pred_check
      _
    $region15: #{tpu_custom_call.1} parent=1 // pred_check_branch
      %19 = sbr.rel (0) target = $region17
    $region16: #{tpu_custom_call.1} parent=1 // pred_region
      _
    $region17: #{tpu_custom_call.1} parent=1 // pred_fallthru
      _
    // Predicated region
    $region18: #{tpu_custom_call.1} parent=1 // pred_check
      _
    $region19: #{tpu_custom_call.1} parent=1 // pred_check_branch
      %21 = sbr.rel (0) target = $region21
    $region20: #{tpu_custom_call.1} parent=1 // pred_region
      _
    $region21: #{tpu_custom_call.1} parent=1 // pred_fallthru
      _
    // Predicated region
    $region22: #{tpu_custom_call.1} parent=1 // pred_check
      _
    $region23: #{tpu_custom_call.1} parent=1 // pred_check_branch
      %23 = sbr.rel (0) target = $region25
    $region24: #{tpu_custom_call.1} parent=1 // pred_region
      _
    $region25: #{tpu_custom_call.1} parent=1 // pred_fallthru
      _
    %v24 = vld [vmem:[%s0] sm:$0xf]
    %v25 = vld [vmem:[%s1] sm:$0xf]
    %v26 = vld [vmem:[%s2] sm:$0xff]
    %v27 = vld [vmem:[%s2 + $0x8] sm:$0xff]
    %v28 = vld [vmem:[%s2 + $0x10] sm:$0xff]
    %v29 = vld [vmem:[%s2 + $0x18] sm:$0xff]
    %s30 = scalar_lea.vmem %s2, 32
    %v31 = vld [vmem:[%s30] sm:$0xff]
    %v32 = vld [vmem:[%s30 + $0x8] sm:$0xff]
    %v33 = vld [vmem:[%s30 + $0x10] sm:$0xff]
    %v34 = vld [vmem:[%s30 + $0x18] sm:$0xff]
    %37 = vrot.lane.b32.xlu0 %v24, 127
    %v38 = vpop.permute.xlu0 %37
    %39 = vrot.lane.b32.xlu0 %v25, 127
    %v40 = vpop.permute.xlu0 %39
    %vm41 = vcmask 1039360
    %v42 = vsel %vm41, %v38, %v40
    %vm43 = vcmask 31744
    %v45 = vsel %vm43, %v31, 0
    %v48 = vsel %vm43, %v32, 0
    %v51 = vsel %vm43, %v33, 0
    %v54 = vsel %vm43, %v34, 0
    %vm56 = vcmask 1043456
    %v57 = vsel %vm56, %v42, 0
    %59 = vmatprep.subr.mxu0 0.0
    %60 = vmatpush1.msra.mxu0 %v57
    %61 = vmatprep.subr.mxu0 0.0
    %62 = vmatpush1.msra.mxu0 0.0
    %63 = vmatprep.subr.mxu0 0.0
    %64 = vmatpush1.msra.mxu0 0.0
    %65 = vmatprep.subr.mxu0 0.0
    %66 = vmatpush1.msra.mxu0 0.0
    %67 = vmatprep.subr.mxu0 0.0
    %68 = vmatpush1.msra.mxu0 0.0
    %69 = vmatprep.subr.mxu0 0.0
    %70 = vmatpush1.msra.mxu0 0.0
    %71 = vmatprep.subr.mxu0 0.0
    %72 = vmatpush1.msra.mxu0 0.0
    %73 = vmatprep.subr.mxu0 0.0
    %74 = vmatpush1.msra.mxu0 0.0
    %75 = vmatprep.subr.mxu0 0.0
    %76 = vmatpush1.msra.mxu0 0.0
    %77 = vmatprep.subr.mxu0 0.0
    %78 = vmatpush1.msra.mxu0 0.0
    %79 = vmatprep.subr.mxu0 0.0
    %80 = vmatpush1.msra.mxu0 0.0
    %81 = vmatprep.subr.mxu0 0.0
    %82 = vmatpush1.msra.mxu0 0.0
    %83 = vmatprep.subr.mxu0 0.0
    %84 = vmatpush1.msra.mxu0 0.0
    %85 = vmatprep.subr.mxu0 0.0
    %86 = vmatpush1.msra.mxu0 0.0
    %87 = vmatprep.subr.mxu0 0.0
    %88 = vmatpush1.msra.mxu0 0.0
    %89 = vmatprep.subr.mxu0 0.0
    %90 = vmatpush1.msra.mxu0 0.0
    %91 = vmatprep.subr.mxu0 0.0
    %92 = vmatpush1.msra.mxu0 0.0
    %93 = vmatprep.subr.mxu0 0.0
    %94 = vmatpush1.msra.mxu0 0.0
    %95 = vmatprep.subr.mxu0 0.0
    %96 = vmatpush1.msra.mxu0 0.0
    %97 = vmatprep.subr.mxu0 0.0
    %98 = vmatpush1.msra.mxu0 0.0
    %99 = vmatprep.subr.mxu0 0.0
    %100 = vmatpush1.msra.mxu0 0.0
    %101 = vmatprep.subr.mxu0 0.0
    %102 = vmatpush1.msra.mxu0 0.0
    %103 = vmatprep.subr.mxu0 0.0
    %104 = vmatpush1.msra.mxu0 0.0
    %105 = vmatprep.subr.mxu0 0.0
    %106 = vmatpush1.msra.mxu0 0.0
    %107 = vmatprep.subr.mxu0 0.0
    %108 = vmatpush1.msra.mxu0 0.0
    %109 = vmatprep.subr.mxu0 0.0
    %110 = vmatpush1.msra.mxu0 0.0
    %111 = vmatprep.subr.mxu0 0.0
    %112 = vmatpush1.msra.mxu0 0.0
    %113 = vmatprep.subr.mxu0 0.0
    %114 = vmatpush1.msra.mxu0 0.0
    %115 = vmatprep.subr.mxu0 0.0
    %116 = vmatpush1.msra.mxu0 0.0
    %117 = vmatprep.subr.mxu0 0.0
    %118 = vmatpush1.msra.mxu0 0.0
    %119 = vmatprep.subr.mxu0 0.0
    %120 = vmatpush1.msra.mxu0 0.0
    %121 = vmatprep.subr.mxu0 0.0
    %122 = vmatpush1.msra.mxu0 0.0
    %123 = vmatprep.mubr.f32.mxu0 0.0
    %124 = vmatmul.mubr.f32.gmra.mrb[0].mxu0 %v45
    %v125 = vpop.f32.mrb[0].mxu0
    %v126 = vadd.f32 0.0, %v125
    %v127 = vpop.f32.mrb[0].mxu0
    %128 = vmatprep.mubr.f32.mxu0 0.0
    %129 = vmatmul.mubr.f32.gmra.mrb[0].mxu0 %v48
    %v130 = vpop.f32.mrb[0].mxu0
    %v131 = vadd.f32 0.0, %v130
    %v132 = vpop.f32.mrb[0].mxu0
    %133 = vmatprep.mubr.f32.mxu0 0.0
    %134 = vmatmul.mubr.f32.gmra.mrb[0].mxu0 %v51
    %v135 = vpop.f32.mrb[0].mxu0
    %v136 = vadd.f32 0.0, %v135
    %v137 = vpop.f32.mrb[0].mxu0
    %138 = vmatprep.mubr.f32.mxu0 0.0
    %139 = vmatmul.mubr.f32.gmra.mrb[0].mxu0 %v54
    %v140 = vpop.f32.mrb[0].mxu0
    %v141 = vadd.f32 0.0, %v140
    %v142 = vpop.f32.mrb[0].mxu0
    %143 = vdwg.mxu0
    %v145 = vsel %vm43, %v26, 0
    %v148 = vsel %vm43, %v27, 0
    %v151 = vsel %vm43, %v28, 0
    %v154 = vsel %vm43, %v29, 0
    %v156 = vsel %vm56, %v24, 0
    %158 = vmatprep.subr.mxu0 0.0
    %159 = vmatpush1.msra.mxu0 %v156
    %160 = vmatprep.subr.mxu0 0.0
    %161 = vmatpush1.msra.mxu0 0.0
    %162 = vmatprep.subr.mxu0 0.0
    %163 = vmatpush1.msra.mxu0 0.0
    %164 = vmatprep.subr.mxu0 0.0
    %165 = vmatpush1.msra.mxu0 0.0
    %166 = vmatprep.subr.mxu0 0.0
    %167 = vmatpush1.msra.mxu0 0.0
    %168 = vmatprep.subr.mxu0 0.0
    %169 = vmatpush1.msra.mxu0 0.0
    %170 = vmatprep.subr.mxu0 0.0
    %171 = vmatpush1.msra.mxu0 0.0
    %172 = vmatprep.subr.mxu0 0.0
    %173 = vmatpush1.msra.mxu0 0.0
    %174 = vmatprep.subr.mxu0 0.0
    %175 = vmatpush1.msra.mxu0 0.0
    %176 = vmatprep.subr.mxu0 0.0
    %177 = vmatpush1.msra.mxu0 0.0
    %178 = vmatprep.subr.mxu0 0.0
    %179 = vmatpush1.msra.mxu0 0.0
    %180 = vmatprep.subr.mxu0 0.0
    %181 = vmatpush1.msra.mxu0 0.0
    %182 = vmatprep.subr.mxu0 0.0
    %183 = vmatpush1.msra.mxu0 0.0
    %184 = vmatprep.subr.mxu0 0.0
    %185 = vmatpush1.msra.mxu0 0.0
    %186 = vmatprep.subr.mxu0 0.0
    %187 = vmatpush1.msra.mxu0 0.0
    %188 = vmatprep.subr.mxu0 0.0
    %189 = vmatpush1.msra.mxu0 0.0
    %190 = vmatprep.subr.mxu0 0.0
    %191 = vmatpush1.msra.mxu0 0.0
    %192 = vmatprep.subr.mxu0 0.0
    %193 = vmatpush1.msra.mxu0 0.0
    %194 = vmatprep.subr.mxu0 0.0
    %195 = vmatpush1.msra.mxu0 0.0
    %196 = vmatprep.subr.mxu0 0.0
    %197 = vmatpush1.msra.mxu0 0.0
    %198 = vmatprep.subr.mxu0 0.0
    %199 = vmatpush1.msra.mxu0 0.0
    %200 = vmatprep.subr.mxu0 0.0
    %201 = vmatpush1.msra.mxu0 0.0
    %202 = vmatprep.subr.mxu0 0.0
    %203 = vmatpush1.msra.mxu0 0.0
    %204 = vmatprep.subr.mxu0 0.0
    %205 = vmatpush1.msra.mxu0 0.0
    %206 = vmatprep.subr.mxu0 0.0
    %207 = vmatpush1.msra.mxu0 0.0
    %208 = vmatprep.subr.mxu0 0.0
    %209 = vmatpush1.msra.mxu0 0.0
    %210 = vmatprep.subr.mxu0 0.0
    %211 = vmatpush1.msra.mxu0 0.0
    %212 = vmatprep.subr.mxu0 0.0
    %213 = vmatpush1.msra.mxu0 0.0
    %214 = vmatprep.subr.mxu0 0.0
    %215 = vmatpush1.msra.mxu0 0.0
    %216 = vmatprep.subr.mxu0 0.0
    %217 = vmatpush1.msra.mxu0 0.0
    %218 = vmatprep.subr.mxu0 0.0
    %219 = vmatpush1.msra.mxu0 0.0
    %220 = vmatprep.subr.mxu0 0.0
    %221 = vmatpush1.msra.mxu0 0.0
    %222 = vmatprep.mubr.f32.mxu0 0.0
    %223 = vmatmul.mubr.f32.gmra.mrb[0].mxu0 %v145
    %v224 = vpop.f32.mrb[0].mxu0
    %v225 = vadd.f32 %v126, %v224
    %v226 = vpop.f32.mrb[0].mxu0
    %227 = vmatprep.mubr.f32.mxu0 0.0
    %228 = vmatmul.mubr.f32.gmra.mrb[0].mxu0 %v148
    %v229 = vpop.f32.mrb[0].mxu0
    %v230 = vadd.f32 %v131, %v229
    %v231 = vpop.f32.mrb[0].mxu0
    %232 = vmatprep.mubr.f32.mxu0 0.0
    %233 = vmatmul.mubr.f32.gmra.mrb[0].mxu0 %v151
    %v234 = vpop.f32.mrb[0].mxu0
    %v235 = vadd.f32 %v136, %v234
    %v236 = vpop.f32.mrb[0].mxu0
    %237 = vmatprep.mubr.f32.mxu0 0.0
    %238 = vmatmul.mubr.f32.gmra.mrb[0].mxu0 %v154
    %v239 = vpop.f32.mrb[0].mxu0
    %v240 = vadd.f32 %v141, %v239
    %v241 = vpop.f32.mrb[0].mxu0
    %242 = vdwg.mxu0
    %s243 = scalar_lea.vmem %s2, 64
    %v244 = vld [vmem:[%s243] sm:$0xff]
    %v245 = vld [vmem:[%s243 + $0x8] sm:$0xff]
    %v246 = vld [vmem:[%s243 + $0x10] sm:$0xff]
    %v247 = vld [vmem:[%s243 + $0x18] sm:$0xff]
    %248 = vrot.lane.b32.xlu0 %v24, 126
    %v249 = vpop.permute.xlu0 %248
    %250 = vrot.lane.b32.xlu0 %v25, 126
    %v251 = vpop.permute.xlu0 %250
    %vm252 = vcmask 1031168
    %v253 = vsel %vm252, %v249, %v251
    %v255 = vsel %vm43, %v244, 0
    %v258 = vsel %vm43, %v245, 0
    %v261 = vsel %vm43, %v246, 0
    %v264 = vsel %vm43, %v247, 0
    %v266 = vsel %vm56, %v253, 0
    %268 = vmatprep.subr.mxu0 0.0
    %269 = vmatpush1.msra.mxu0 %v266
    %270 = vmatprep.subr.mxu0 0.0
    %271 = vmatpush1.msra.mxu0 0.0
    %272 = vmatprep.subr.mxu0 0.0
    %273 = vmatpush1.msra.mxu0 0.0
    %274 = vmatprep.subr.mxu0 0.0
    %275 = vmatpush1.msra.mxu0 0.0
    %276 = vmatprep.subr.mxu0 0.0
    %277 = vmatpush1.msra.mxu0 0.0
    %278 = vmatprep.subr.mxu0 0.0
    %279 = vmatpush1.msra.mxu0 0.0
    %280 = vmatprep.subr.mxu0 0.0
    %281 = vmatpush1.msra.mxu0 0.0
    %282 = vmatprep.subr.mxu0 0.0
    %283 = vmatpush1.msra.mxu0 0.0
    %284 = vmatprep.subr.mxu0 0.0
    %285 = vmatpush1.msra.mxu0 0.0
    %286 = vmatprep.subr.mxu0 0.0
    %287 = vmatpush1.msra.mxu0 0.0
    %288 = vmatprep.subr.mxu0 0.0
    %289 = vmatpush1.msra.mxu0 0.0
    %290 = vmatprep.subr.mxu0 0.0
    %291 = vmatpush1.msra.mxu0 0.0
    %292 = vmatprep.subr.mxu0 0.0
    %293 = vmatpush1.msra.mxu0 0.0
    %294 = vmatprep.subr.mxu0 0.0
    %295 = vmatpush1.msra.mxu0 0.0
    %296 = vmatprep.subr.mxu0 0.0
    %297 = vmatpush1.msra.mxu0 0.0
    %298 = vmatprep.subr.mxu0 0.0
    %299 = vmatpush1.msra.mxu0 0.0
    %300 = vmatprep.subr.mxu0 0.0
    %301 = vmatpush1.msra.mxu0 0.0
    %302 = vmatprep.subr.mxu0 0.0
    %303 = vmatpush1.msra.mxu0 0.0
    %304 = vmatprep.subr.mxu0 0.0
    %305 = vmatpush1.msra.mxu0 0.0
    %306 = vmatprep.subr.mxu0 0.0
    %307 = vmatpush1.msra.mxu0 0.0
    %308 = vmatprep.subr.mxu0 0.0
    %309 = vmatpush1.msra.mxu0 0.0
    %310 = vmatprep.subr.mxu0 0.0
    %311 = vmatpush1.msra.mxu0 0.0
    %312 = vmatprep.subr.mxu0 0.0
    %313 = vmatpush1.msra.mxu0 0.0
    %314 = vmatprep.subr.mxu0 0.0
    %315 = vmatpush1.msra.mxu0 0.0
    %316 = vmatprep.subr.mxu0 0.0
    %317 = vmatpush1.msra.mxu0 0.0
    %318 = vmatprep.subr.mxu0 0.0
    %319 = vmatpush1.msra.mxu0 0.0
    %320 = vmatprep.subr.mxu0 0.0
    %321 = vmatpush1.msra.mxu0 0.0
    %322 = vmatprep.subr.mxu0 0.0
    %323 = vmatpush1.msra.mxu0 0.0
    %324 = vmatprep.subr.mxu0 0.0
    %325 = vmatpush1.msra.mxu0 0.0
    %326 = vmatprep.subr.mxu0 0.0
    %327 = vmatpush1.msra.mxu0 0.0
    %328 = vmatprep.subr.mxu0 0.0
    %329 = vmatpush1.msra.mxu0 0.0
    %330 = vmatprep.subr.mxu0 0.0
    %331 = vmatpush1.msra.mxu0 0.0
    %332 = vmatprep.mubr.f32.mxu0 0.0
    %333 = vmatmul.mubr.f32.gmra.mrb[0].mxu0 %v255
    %v334 = vpop.f32.mrb[0].mxu0
    %v335 = vadd.f32 0.0, %v334
    %v336 = vpop.f32.mrb[0].mxu0
    %337 = vmatprep.mubr.f32.mxu0 0.0
    %338 = vmatmul.mubr.f32.gmra.mrb[0].mxu0 %v258
    %v339 = vpop.f32.mrb[0].mxu0
    %v340 = vadd.f32 0.0, %v339
    %v341 = vpop.f32.mrb[0].mxu0
    %342 = vmatprep.mubr.f32.mxu0 0.0
    %343 = vmatmul.mubr.f32.gmra.mrb[0].mxu0 %v261
    %v344 = vpop.f32.mrb[0].mxu0
    %v345 = vadd.f32 0.0, %v344
    %v346 = vpop.f32.mrb[0].mxu0
    %347 = vmatprep.mubr.f32.mxu0 0.0
    %348 = vmatmul.mubr.f32.gmra.mrb[0].mxu0 %v264
    %v349 = vpop.f32.mrb[0].mxu0
    %v350 = vadd.f32 0.0, %v349
    %v351 = vpop.f32.mrb[0].mxu0
    %352 = vdwg.mxu0
    %v353 = vadd.f32 %v225, %v335
    %v354 = vadd.f32 %v230, %v340
    %v355 = vadd.f32 %v235, %v345
    %v356 = vadd.f32 %v240, %v350
    %v357 = vld [vmem:[%s3] sm:$0xff]
    %v358 = vld [vmem:[%s3 + $0x8] sm:$0xff]
    %v359 = vld [vmem:[%s3 + $0x10] sm:$0xff]
    %v360 = vld [vmem:[%s3 + $0x18] sm:$0xff]
    %362 = vset.pattern.permute.xlu0 0
    %363 = vperm.xlu0 %362, %v357
    %v364 = vpop.permute.xlu0 %363
    %367 = vset.pattern.permute.xlu0 0
    %368 = vperm.xlu0 %367, %v358
    %v369 = vpop.permute.xlu0 %368
    %372 = vset.pattern.permute.xlu0 0
    %373 = vperm.xlu0 %372, %v359
    %v374 = vpop.permute.xlu0 %373
    %377 = vset.pattern.permute.xlu0 0
    %378 = vperm.xlu0 %377, %v360
    %v379 = vpop.permute.xlu0 %378
    %v381 = vadd.f32 %v353, %v364
    %v382 = vadd.f32 %v354, %v369
    %v383 = vadd.f32 %v355, %v374
    %v384 = vadd.f32 %v356, %v379
    %v385 = vxor.u32 %v381, 2147483648
    %v386 = vxor.u32 %v382, 2147483648
    %v387 = vxor.u32 %v383, 2147483648
    %v388 = vxor.u32 %v384, 2147483648
    %v389 = vmul.f32 %v385, 1.442695
    %v390 = vpow.pop %v389
    %v391 = vmul.f32 %v386, 1.442695
    %v392 = vpow.pop %v391
    %v393 = vmul.f32 %v387, 1.442695
    %v394 = vpow.pop %v393
    %v395 = vmul.f32 %v388, 1.442695
    %v396 = vpow.pop %v395
    %v397 = vadd.f32 %v390, 1.0
    %v398 = vadd.f32 %v392, 1.0
    %v399 = vadd.f32 %v394, 1.0
    %v400 = vadd.f32 %v396, 1.0
    %v401 = vrcp.pop %v397
    %v402 = vmul.f32 1.0, %v401
    %v403 = vrcp.pop %v398
    %v404 = vmul.f32 1.0, %v403
    %v405 = vrcp.pop %v399
    %v406 = vmul.f32 1.0, %v405
    %v407 = vrcp.pop %v400
    %v408 = vmul.f32 1.0, %v407
    %v409 = vld [vmem:[%s4] sm:$0xff]
    %v410 = vld [vmem:[%s4 + $0x8] sm:$0xff]
    %v411 = vld [vmem:[%s4 + $0x10] sm:$0xff]
    %v412 = vld [vmem:[%s4 + $0x18] sm:$0xff]
    %414 = vset.pattern.permute.xlu0 0
    %415 = vperm.xlu0 %414, %v409
    %v416 = vpop.permute.xlu0 %415
    %419 = vset.pattern.permute.xlu0 0
    %420 = vperm.xlu0 %419, %v410
    %v421 = vpop.permute.xlu0 %420
    %424 = vset.pattern.permute.xlu0 0
    %425 = vperm.xlu0 %424, %v411
    %v426 = vpop.permute.xlu0 %425
    %429 = vset.pattern.permute.xlu0 0
    %430 = vperm.xlu0 %429, %v412
    %v431 = vpop.permute.xlu0 %430
    %v433 = vmul.f32 %v402, %v416
    %v434 = vmul.f32 %v404, %v421
    %v435 = vmul.f32 %v406, %v426
    %v436 = vmul.f32 %v408, %v431
    %v437 = vrot.slane %v433, 4
    %v438 = vadd.f32 %v433, %v437
    %v439 = vrot.slane %v438, 2
    %v440 = vadd.f32 %v438, %v439
    %v441 = vrot.slane %v440, 1
    %v442 = vadd.f32 %v440, %v441
    %v443 = vrot.slane %v434, 4
    %v444 = vadd.f32 %v434, %v443
    %v445 = vrot.slane %v444, 2
    %v446 = vadd.f32 %v444, %v445
    %v447 = vrot.slane %v446, 1
    %v448 = vadd.f32 %v446, %v447
    %v449 = vrot.slane %v435, 4
    %v450 = vadd.f32 %v435, %v449
    %v451 = vrot.slane %v450, 2
    %v452 = vadd.f32 %v450, %v451
    %v453 = vrot.slane %v452, 1
    %v454 = vadd.f32 %v452, %v453
    %v455 = vrot.slane %v436, 4
    %v456 = vadd.f32 %v436, %v455
    %v457 = vrot.slane %v456, 2
    %v458 = vadd.f32 %v456, %v457
    %v459 = vrot.slane %v458, 1
    %v460 = vadd.f32 %v458, %v459
    %v461 = vld [vmem:[%s5] sm:$0xf]
    %463 = vset.pattern.permute.xlu0 0
    %464 = vperm.xlu0 %463, %v461
    %v465 = vpop.permute.xlu0 %464
    %v466 = vrot.slane %v465, 1
    %v467 = vrot.slane %v465, 2
    %v468 = vrot.slane %v465, 3
    %v473 = vadd.f32 %v442, %v465
    %v474 = vadd.f32 %v448, %v466
    %v475 = vadd.f32 %v454, %v467
    %v476 = vadd.f32 %v460, %v468
    %v481 = vrot.slane %v474, 7
    %vm482 = vcmask 1041409
    %v483 = vsel %vm482, %v481, %v473
    %v484 = vrot.slane %v475, 6
    %vm485 = vcmask 1042434
    %v486 = vsel %vm485, %v484, %v483
    %v487 = vrot.slane %v476, 5
    %vm488 = vcmask 1043459
    %v489 = vsel %vm488, %v487, %v486
    %491 = vst [vmem:[#allocation2] sm:$0xf] %v489
    // Predicated region
    $region26: #{tpu_custom_call.1} parent=1 // pred_check
      _
    $region27: #{tpu_custom_call.1} parent=1 // pred_check_branch
      %493 = sbr.rel (0) target = $region29
    $region28: #{tpu_custom_call.1} parent=1 // pred_region
      %s495 = ssub.s32 64, 64
      %496 = vsyncadd [#allocation3], %s495
      %s498 = sshll.u32 [#allocation2], 4
      %s499 = int_to_ptr.vmem [resolvable:$true] %s498
      %501 = dma.vmem_to_hbm [thread:$0]  %s499, 64, %s6, [#allocation3]
    $region29: #{tpu_custom_call.1} parent=1 // pred_fallthru
      _
    // Predicated region
    $region30: #{tpu_custom_call.1} parent=1 // pred_check
      _
    $region31: #{tpu_custom_call.1} parent=1 // pred_check_branch
      %503 = sbr.rel (0) target = $region33
    $region32: #{tpu_custom_call.1} parent=1 // pred_region
      %504 = dma.done [#allocation3], 64
    $region33: #{tpu_custom_call.1} parent=1 // pred_fallthru
      _
    %505 = vsyncpa [#allocation3], 1

</llo_original>
